<compile_context>
chip_gen: v6e
topology: v6e:2x2x1
jax: 0.10.0
libtpu: 0.0.40
codegen_flags: <defaults>
</compile_context>

<pallas_src>
import jax
import jax.numpy as jnp
from jax.experimental import pallas as pl
from jax.experimental.pallas import tpu as pltpu

BN_EPS = 1e-5
_LANE = 128
_MAX_TILE_L = 32768  # absolute lane-tile cap (already 0.5-2 MiB buffers at small
                     # channel counts; keeps DMAs chunky without absurd tiles)


def _vmem_capacity_bytes():
    """Generation-aware VMEM size (64 MiB/TC on v7x, 128 MiB on v5e/v6e)."""
    try:
        return int(pltpu.get_tpu_info().vmem_capacity_bytes)
    except Exception:
        return 64 << 20  # conservative (v7x per-core) fallback


def _pick_tiling(length, c_in, c_out):
    """Lane-axis tile sized from a VMEM budget; always a multiple of 128."""
    vmem_cap = _vmem_capacity_bytes()
    bytes_per_l = 4 * (c_in + c_out)  # f32 x-tile + out-tile bytes per length elem
    # Target single-buffer in+out footprint ~ vmem_cap/16 (the pipeline
    # double-buffers -> ~vmem_cap/8 live), at least 2 MiB, capped at _MAX_TILE_L.
    target_bytes = max(vmem_cap // 16, 2 << 20)
    tile_max = max(_LANE, min(target_bytes // bytes_per_l, _MAX_TILE_L))
    tile_max = (tile_max // _LANE) * _LANE

    l_pad128 = pl.cdiv(length, _LANE) * _LANE        # lane-dense (unmasked vst)
    num_lt = pl.cdiv(l_pad128, tile_max)
    # Balance tiles so padding never exceeds ~128 per tile.
    tile_l = pl.cdiv(pl.cdiv(l_pad128, num_lt), _LANE) * _LANE
    padded_l = tile_l * num_lt

    # Scoped-VMEM limit: well above what the tiles need, with headroom below
    # physical capacity (never scavenge right up to the edge).
    vmem_limit = int(min(vmem_cap - (8 << 20), vmem_cap * 7 // 8))
    vmem_limit = max(vmem_limit, 32 << 20)
    return tile_l, num_lt, padded_l, vmem_limit


def _stats_kernel(x_ref, w_ref, sum_ref, sq_ref):
    """Per-n partial sums of u = W @ x and u^2 over the L axis."""
    li = pl.program_id(1)

    @pl.when(li == 0)
    def _init():
        sum_ref[...] = jnp.zeros_like(sum_ref)
        sq_ref[...] = jnp.zeros_like(sq_ref)

    # u = W @ x  (conv bias omitted: cancels exactly in training-mode BN).
    u = jnp.dot(w_ref[...], x_ref[...], preferred_element_type=jnp.float32)
    # Per-channel partial sums: lane-axis reduce (XLU), single traversal of u.
    sum_ref[...] += jnp.sum(u, axis=-1, keepdims=True)
    sq_ref[...] += jnp.sum(u * u, axis=-1, keepdims=True)


def _norm_kernel(x_ref, w_ref, s_ref, t_ref, o_ref):
    u = jnp.dot(w_ref[...], x_ref[...], preferred_element_type=jnp.float32)
    z = u * s_ref[...] + t_ref[...]          # single FMA per element
    # sigmoid: exp -> EUP, approx reciprocal -> EUP (keeps VPU slots free);
    # ~1e-3 relative error, well inside parity tolerance.
    o_ref[...] = pl.reciprocal(1.0 + jnp.exp(-z), approx=True).astype(o_ref.dtype)


def block_forward(x_ncl, weight, bias, gamma, beta):
    """x_ncl: (N, Cin, L) f32; weight: (Cout, Cin, 1); bias/gamma/beta: (Cout,).

    Returns (N, Cout, L) f32 = Sigmoid(BatchNorm1d_train(Conv1d_k1(x))).
    """
    del bias  # cancels exactly in training-mode BatchNorm (see header comment)
    n, c_in, length = x_ncl.shape
    c_out = weight.shape[0]

    x = x_ncl.astype(jnp.float32)
    w = weight[:, :, 0].astype(jnp.float32)                 # (Cout, Cin)

    tile_l, num_lt, padded_l, vmem_limit = _pick_tiling(length, c_in, c_out)
    if padded_l != length:
        # Zero padding contributes 0 to W@x and its square; stats divide by the
        # true element count, so they stay exact; the tail is sliced off below.
        x = jnp.pad(x, ((0, 0), (0, 0), (0, padded_l - length)))

    x_spec = pl.BlockSpec((None, c_in, tile_l), lambda ni, li: (ni, 0, li))
    w_spec = pl.BlockSpec((c_out, c_in), lambda ni, li: (0, 0))      # resident
    stat_spec = pl.BlockSpec((None, c_out, 1), lambda ni, li: (ni, 0, 0))

    # ---- Pass 1: per-n partial per-channel sums (N parallel, L reduction) ----
    sum_n, sq_n = pl.pallas_call(
        _stats_kernel,
        out_shape=(jax.ShapeDtypeStruct((n, c_out, 1), jnp.float32),
                   jax.ShapeDtypeStruct((n, c_out, 1), jnp.float32)),
        grid_spec=pltpu.PrefetchScalarGridSpec(
            num_scalar_prefetch=0,
            grid=(n, num_lt),
            in_specs=[x_spec, w_spec],
            out_specs=(stat_spec, stat_spec)),
        compiler_params=pltpu.CompilerParams(
            dimension_semantics=("parallel", "arbitrary"),
            vmem_limit_bytes=vmem_limit),
    )(x, w)

    # ---- Tiny BN fold in plain JAX: s = gamma*rsqrt(var+eps), t = beta-mean*s ----
    inv_count = 1.0 / float(n * length)
    sum_u = jnp.sum(sum_n[:, :, 0], axis=0)                  # (Cout,)
    sq_u = jnp.sum(sq_n[:, :, 0], axis=0)                    # (Cout,)
    mean_u = sum_u * inv_count
    var_u = jnp.maximum(sq_u * inv_count - mean_u * mean_u, 0.0)
    s = gamma.astype(jnp.float32) * jax.lax.rsqrt(var_u + BN_EPS)
    t = beta.astype(jnp.float32) - mean_u * s
    s_col = s.reshape(c_out, 1)
    t_col = t.reshape(c_out, 1)

    # ---- Pass 2: normalize + sigmoid, fully parallel over (N, L tiles) ----
    col_spec = pl.BlockSpec((c_out, 1), lambda ni, li: (0, 0))        # resident
    out = pl.pallas_call(
        _norm_kernel,
        out_shape=jax.ShapeDtypeStruct((n, c_out, padded_l), jnp.float32),
        grid_spec=pltpu.PrefetchScalarGridSpec(
            num_scalar_prefetch=0,
            grid=(n, num_lt),
            in_specs=[x_spec, w_spec, col_spec, col_spec],
            out_specs=pl.BlockSpec((None, c_out, tile_l),
                                   lambda ni, li: (ni, 0, li))),
        compiler_params=pltpu.CompilerParams(
            dimension_semantics=("parallel", "parallel"),
            vmem_limit_bytes=vmem_limit),
    )(x, w, s_col, t_col)

    if padded_l != length:
        out = out[:, :, :length]
    return out


def _reference(x_ncl, weight, bias, gamma, beta):
    """Pure-JAX reference of the training-mode forward pass."""
    y = jnp.einsum('oc,ncl->nol', weight[:, :, 0], x_ncl) + bias[None, :, None]
    mean = jnp.mean(y, axis=(0, 2), keepdims=True)
    var = jnp.mean((y - mean) ** 2, axis=(0, 2), keepdims=True)
    y_hat = (y - mean) * jax.lax.rsqrt(var + BN_EPS)
    z = gamma[None, :, None] * y_hat + beta[None, :, None]
    return jax.nn.sigmoid(z)


if __name__ == "__main__":
    key = jax.random.PRNGKey(0)
    k_x, k_w, k_b = jax.random.split(key, 3)

    N, C_IN, C_OUT, L = 2, 4, 8, 16

    x = jax.random.normal(k_x, (N, C_IN, L), dtype=jnp.float32)
    # Deterministic parameter init (shapes per nn.Conv1d / nn.BatchNorm1d)
    weight = jax.random.normal(k_w, (C_OUT, C_IN, 1), dtype=jnp.float32) * 0.1
    bias = jax.random.normal(k_b, (C_OUT,), dtype=jnp.float32) * 0.1
    gamma = jnp.ones((C_OUT,), dtype=jnp.float32)   # BatchNorm default weight
    beta = jnp.zeros((C_OUT,), dtype=jnp.float32)   # BatchNorm default bias

    out = block_forward(x, weight, bias, gamma, beta)
    jax.block_until_ready(out)

    assert out.shape == (N, C_OUT, L)
    assert bool(jnp.all(jnp.isfinite(out)))

    ref = _reference(x, weight, bias, gamma, beta)
    max_err = float(jnp.max(jnp.abs(out - ref)))
    assert max_err < 1e-2, f"max abs error vs reference: {max_err}"

    print("KERNEL_OK")
</pallas_src>

<mosaic_0001>
module attributes {stable_mosaic.version = 11 : i64} {
  func.func @_stats_kernel(%arg0: i32, %arg1: i32, %arg2: memref<1x4x128xf32, #tpu.memory_space<vmem>>, %arg3: memref<8x4xf32, #tpu.memory_space<vmem>>, %arg4: memref<1x8x1xf32, #tpu.memory_space<vmem>>, %arg5: memref<1x8x1xf32, #tpu.memory_space<vmem>>) attributes {dimension_semantics = [#tpu.dimension_semantics<parallel>, #tpu.dimension_semantics<arbitrary>], iteration_bounds = array<i64: 2, 1>, scalar_prefetch = 0 : i64, scratch_operands = 0 : i64, tpu.core_type = #tpu.core_type<tc>, window_params = [{transform_indices = @transform_0, window_bounds = array<i64: 1, 4, 128>}, {pipeline_mode = #tpu.pipeline_mode<synchronous>, transform_indices = @transform_1, window_bounds = array<i64: 8, 4>}, {transform_indices = @transform_2, window_bounds = array<i64: 1, 8, 1>}, {transform_indices = @transform_3, window_bounds = array<i64: 1, 8, 1>}]} {
    %c0_i32 = arith.constant 0 : i32
    %0 = arith.cmpi eq, %arg1, %c0_i32 : i32
    %1 = arith.extui %0 : i1 to i32
    %c0_i32_0 = arith.constant 0 : i32
    %2 = arith.cmpi ne, %1, %c0_i32_0 : i32
    scf.if %2 {
      %cst_19 = arith.constant 0.000000e+00 : f32
      %24 = vector.broadcast %cst_19 : f32 to vector<8x1xf32>
      %c0_20 = arith.constant 0 : index
      %c0_21 = arith.constant 0 : index
      %c0_22 = arith.constant 0 : index
      %25 = vector.load %arg4[%c0_20, %c0_21, %c0_22] : memref<1x8x1xf32, #tpu.memory_space<vmem>>, vector<1x8x1xf32>
      %26 = vector.shape_cast %25 : vector<1x8x1xf32> to vector<8x1xf32>
      %27 = vector.shape_cast %24 : vector<8x1xf32> to vector<1x8x1xf32>
      tpu.vector_store %arg4[%c0_20, %c0_21, %c0_22], %27 {strides = array<i32>} : memref<1x8x1xf32, #tpu.memory_space<vmem>>, vector<1x8x1xf32>,
      %cst_23 = arith.constant 0.000000e+00 : f32
      %28 = vector.broadcast %cst_23 : f32 to vector<8x1xf32>
      %c0_24 = arith.constant 0 : index
      %c0_25 = arith.constant 0 : index
      %c0_26 = arith.constant 0 : index
      %29 = vector.load %arg5[%c0_24, %c0_25, %c0_26] : memref<1x8x1xf32, #tpu.memory_space<vmem>>, vector<1x8x1xf32>
      %30 = vector.shape_cast %29 : vector<1x8x1xf32> to vector<8x1xf32>
      %31 = vector.shape_cast %28 : vector<8x1xf32> to vector<1x8x1xf32>
      tpu.vector_store %arg5[%c0_24, %c0_25, %c0_26], %31 {strides = array<i32>} : memref<1x8x1xf32, #tpu.memory_space<vmem>>, vector<1x8x1xf32>,
    } else {
    }
    %c0 = arith.constant 0 : index
    %c0_1 = arith.constant 0 : index
    %3 = vector.load %arg3[%c0, %c0_1] : memref<8x4xf32, #tpu.memory_space<vmem>>, vector<8x4xf32>
    %c0_2 = arith.constant 0 : index
    %c0_3 = arith.constant 0 : index
    %c0_4 = arith.constant 0 : index
    %4 = vector.load %arg2[%c0_2, %c0_3, %c0_4] : memref<1x4x128xf32, #tpu.memory_space<vmem>>, vector<1x4x128xf32>
    %5 = vector.shape_cast %4 : vector<1x4x128xf32> to vector<4x128xf32>
    %cst = arith.constant dense<0.000000e+00> : vector<8x128xf32>
    %6 = tpu.matmul %3, %5, %cst {dimension_numbers = #tpu.dot_dimension_numbers<[1], [0], [0], [1], [0, 0, 1, 1], [], []>} : vector<8x4xf32>, vector<4x128xf32>, vector<8x128xf32> -> vector<8x128xf32>
    %c0_5 = arith.constant 0 : index
    %c0_6 = arith.constant 0 : index
    %c0_7 = arith.constant 0 : index
    %7 = vector.load %arg4[%c0_5, %c0_6, %c0_7] : memref<1x8x1xf32, #tpu.memory_space<vmem>>, vector<1x8x1xf32>
    %8 = vector.shape_cast %7 : vector<1x8x1xf32> to vector<8x1xf32>
    %cst_8 = arith.constant dense<0.000000e+00> : vector<8xf32>
    %9 = vector.multi_reduction <add>, %6, %cst_8 [1] : vector<8x128xf32> to vector<8xf32>
    %10 = vector.shape_cast %9 : vector<8xf32> to vector<8x1xf32>
    %11 = arith.addf %8, %10 : vector<8x1xf32>
    %c0_9 = arith.constant 0 : index
    %c0_10 = arith.constant 0 : index
    %c0_11 = arith.constant 0 : index
    %12 = vector.load %arg4[%c0_9, %c0_10, %c0_11] : memref<1x8x1xf32, #tpu.memory_space<vmem>>, vector<1x8x1xf32>
    %13 = vector.shape_cast %12 : vector<1x8x1xf32> to vector<8x1xf32>
    %14 = vector.shape_cast %11 : vector<8x1xf32> to vector<1x8x1xf32>
    tpu.vector_store %arg4[%c0_9, %c0_10, %c0_11], %14 {strides = array<i32>} : memref<1x8x1xf32, #tpu.memory_space<vmem>>, vector<1x8x1xf32>,
    %c0_12 = arith.constant 0 : index
    %c0_13 = arith.constant 0 : index
    %c0_14 = arith.constant 0 : index
    %15 = vector.load %arg5[%c0_12, %c0_13, %c0_14] : memref<1x8x1xf32, #tpu.memory_space<vmem>>, vector<1x8x1xf32>
    %16 = vector.shape_cast %15 : vector<1x8x1xf32> to vector<8x1xf32>
    %17 = arith.mulf %6, %6 : vector<8x128xf32>
    %cst_15 = arith.constant dense<0.000000e+00> : vector<8xf32>
    %18 = vector.multi_reduction <add>, %17, %cst_15 [1] : vector<8x128xf32> to vector<8xf32>
    %19 = vector.shape_cast %18 : vector<8xf32> to vector<8x1xf32>
    %20 = arith.addf %16, %19 : vector<8x1xf32>
    %c0_16 = arith.constant 0 : index
    %c0_17 = arith.constant 0 : index
    %c0_18 = arith.constant 0 : index
    %21 = vector.load %arg5[%c0_16, %c0_17, %c0_18] : memref<1x8x1xf32, #tpu.memory_space<vmem>>, vector<1x8x1xf32>
    %22 = vector.shape_cast %21 : vector<1x8x1xf32> to vector<8x1xf32>
    %23 = vector.shape_cast %20 : vector<8x1xf32> to vector<1x8x1xf32>
    tpu.vector_store %arg5[%c0_16, %c0_17, %c0_18], %23 {strides = array<i32>} : memref<1x8x1xf32, #tpu.memory_space<vmem>>, vector<1x8x1xf32>,
    return
  }
  func.func @transform_0(%arg0: i32, %arg1: i32) -> (i32, i32, i32) {
    %c0_i32 = arith.constant 0 : i32
    %c0_i32_0 = arith.constant 0 : i32
    return %arg0, %c0_i32, %arg1 : i32, i32, i32
  }
  func.func @transform_1(%arg0: i32, %arg1: i32) -> (i32, i32) {
    %c0_i32 = arith.constant 0 : i32
    %c0_i32_0 = arith.constant 0 : i32
    %c0_i32_1 = arith.constant 0 : i32
    return %c0_i32, %c0_i32_0 : i32, i32
  }
  func.func @transform_2(%arg0: i32, %arg1: i32) -> (i32, i32, i32) {
    %c0_i32 = arith.constant 0 : i32
    %c0_i32_0 = arith.constant 0 : i32
    %c0_i32_1 = arith.constant 0 : i32
    return %arg0, %c0_i32, %c0_i32_0 : i32, i32, i32
  }
  func.func @transform_3(%arg0: i32, %arg1: i32) -> (i32, i32, i32) {
    %c0_i32 = arith.constant 0 : i32
    %c0_i32_0 = arith.constant 0 : i32
    %c0_i32_1 = arith.constant 0 : i32
    return %arg0, %c0_i32, %c0_i32_0 : i32, i32, i32
  }
}

</mosaic_0001>

<llo_original>
// kernel: tpu_custom_call.1
$region0: #{tpu_custom_call.1}
  #allocation0 [shape = 'u32[]', space=smem, size = 0x4, offset = 0x4, fixed_abs, tag = 'smem constant byte address 0x4 - core index']
  #allocation1 [shape = 'u32[144,128]{1,0:T(1,128)}', space=vmem, size = 0x12000, scoped, tag = 'internal scratch']
  %s0 = inlined_call_operand.vmem [shape: f32[2,4,128], index: 0, kind: input, shape index: {}]
  %s1 = inlined_call_operand.vmem [shape: f32[8,4], index: 1, kind: input, shape index: {}]
  %s2 = inlined_call_operand.vmem [shape: f32[2,8,1], index: 2, kind: output, shape index: {0}]
  %s3 = inlined_call_operand.vmem [shape: f32[2,8,1], index: 3, kind: output, shape index: {1}]
  %4 = xla_tuple %s2, %s3
  %s5 = sld [smem:[#allocation0]]
  $region53: #{tpu_custom_call.1} parent=0
    _
  %s7 = ssub.s32 1, %s5
  %s8 = scalar_select 0, %s7, %s5
  loop: start=0, step=1, limit=4
  $region2: #{tpu_custom_call.1} parent=0 // loop_pre_header
    _
  $region3: #{tpu_custom_call.1} parent=0 // loop_header
    %s10 = sphi 0, %s14
    %p11 = scmp.ge.s32.totalorder %s10, 4
    %s17 = sphi 0, %s29
    %s18 = sphi 0, %s25
    %s19 = sphi 0, %s17
    %s20 = sphi 0, %s18
    %s21 = sphi 0, %s19
    %s22 = sphi 0, %s20
    %s34 = sphi 0, %s36
    %s37 = sphi 0, %s34
    %s38 = sphi 0, %s37
    %s54 = sphi 0, %s38
    %s58 = sphi 0, %s58
    %s60 = sphi 0, %s58
    %s61 = sphi 0, %s60
    %s75 = sphi 0, %s61
    %s81 = sphi 0, %s83
    %s84 = sphi 0, %s81
    %s85 = sphi 0, %s84
    %s101 = sphi 0, %s85
    %s107 = sphi 0, %s109
    %s110 = sphi 0, %s107
    %s111 = sphi 0, %s110
    %s127 = sphi 0, %s111
  $region4: #{tpu_custom_call.1} parent=0 // loop_header_branch
    %13 = sbr.rel (%p11) target = $region8
  $region5: #{tpu_custom_call.1} parent=0 // loop_body
    %s15 = ssub.s32 %s10, 1
    %s16 = ssub.s32 %s10, 2
    %s23 = sadd.s32 1, %s18
    %p24 = scmp.ge.s32.totalorder %s23, 1
    %s25 = scalar_select %p24, 0, %s23
    %s26 = sadd.s32 1, %s17
    %s27 = scalar_select %p24, %s26, %s17
    %p28 = scmp.ge.s32.totalorder %s27, 2
    %s29 = scalar_select %p28, 0, %s27
    %s30 = ssub.s32 %s17, %s29
    %s31 = ssub.s32 %s18, %s25
    %s32 = sor.u32 %s30, %s31
    %p33 = scmp.eq.s32.totalorder %s32, 0
    %s35 = sadd.s32 %s34, 1
    %s36 = scalar_select %p33, %s34, %s35
    %p39 = pneg %p33
    %p40 = scmp.eq.s32.totalorder %s10, 1
    %p41 = por %p39, %p40
    %p42 = scmp.ne.s32.totalorder %s34, %s37
    %p43 = scmp.eq.s32.totalorder %s10, 0
    %p44 = por %p42, %p43
    %p45 = scmp.ne.s32.totalorder %s34, %s37
    %p46 = scmp.eq.s32.totalorder %s15, 1
    %p47 = por %p45, %p46
    %p48 = scmp.ne.s32.totalorder %s37, %s38
    %p49 = scmp.eq.s32.totalorder %s15, 0
    %p50 = por %p48, %p49
    %p51 = scmp.ne.s32.totalorder %s37, %s38
    %p52 = scmp.eq.s32.totalorder %s16, 1
    %p53 = por %p51, %p52
    %p55 = scmp.ne.s32.totalorder %s38, %s54
    %p56 = scmp.eq.s32.totalorder %s16, 0
    %p57 = por %p55, %p56
    %s59 = sadd.s32 %s58, 1
    %p62 = scmp.eq.s32.totalorder %s10, 1
    %p63 = scmp.ne.s32.totalorder %s58, %s60
    %p64 = scmp.eq.s32.totalorder %s10, 0
    %p65 = por %p63, %p64
    %p66 = scmp.ne.s32.totalorder %s58, %s60
    %p67 = scmp.eq.s32.totalorder %s15, 1
    %p68 = por %p66, %p67
    %p69 = scmp.ne.s32.totalorder %s60, %s61
    %p70 = scmp.eq.s32.totalorder %s15, 0
    %p71 = por %p69, %p70
    %p72 = scmp.ne.s32.totalorder %s60, %s61
    %p73 = scmp.eq.s32.totalorder %s16, 1
    %p74 = por %p72, %p73
    %p76 = scmp.ne.s32.totalorder %s61, %s75
    %p77 = scmp.eq.s32.totalorder %s16, 0
    %p78 = por %p76, %p77
    %s79 = ssub.s32 %s17, %s29
    %p80 = scmp.eq.s32.totalorder %s79, 0
    %s82 = sadd.s32 %s81, 1
    %s83 = scalar_select %p80, %s81, %s82
    %p86 = pneg %p80
    %p87 = scmp.eq.s32.totalorder %s10, 1
    %p88 = por %p86, %p87
    %p89 = scmp.ne.s32.totalorder %s81, %s84
    %p90 = scmp.eq.s32.totalorder %s10, 0
    %p91 = por %p89, %p90
    %p92 = scmp.ne.s32.totalorder %s81, %s84
    %p93 = scmp.eq.s32.totalorder %s15, 1
    %p94 = por %p92, %p93
    %p95 = scmp.ne.s32.totalorder %s84, %s85
    %p96 = scmp.eq.s32.totalorder %s15, 0
    %p97 = por %p95, %p96
    %p98 = scmp.ne.s32.totalorder %s84, %s85
    %p99 = scmp.eq.s32.totalorder %s16, 1
    %p100 = por %p98, %p99
    %p102 = scmp.ne.s32.totalorder %s85, %s101
    %p103 = scmp.eq.s32.totalorder %s16, 0
    %p104 = por %p102, %p103
    %s105 = ssub.s32 %s17, %s29
    %p106 = scmp.eq.s32.totalorder %s105, 0
    %s108 = sadd.s32 %s107, 1
    %s109 = scalar_select %p106, %s107, %s108
    %p112 = pneg %p106
    %p113 = scmp.eq.s32.totalorder %s10, 1
    %p114 = por %p112, %p113
    %p115 = scmp.ne.s32.totalorder %s107, %s110
    %p116 = scmp.eq.s32.totalorder %s10, 0
    %p117 = por %p115, %p116
    %p118 = scmp.ne.s32.totalorder %s107, %s110
    %p119 = scmp.eq.s32.totalorder %s15, 1
    %p120 = por %p118, %p119
    %p121 = scmp.ne.s32.totalorder %s110, %s111
    %p122 = scmp.eq.s32.totalorder %s15, 0
    %p123 = por %p121, %p122
    %p124 = scmp.ne.s32.totalorder %s110, %s111
    %p125 = scmp.eq.s32.totalorder %s16, 1
    %p126 = por %p124, %p125
    %p128 = scmp.ne.s32.totalorder %s111, %s127
    %p129 = scmp.eq.s32.totalorder %s16, 0
    %p130 = por %p128, %p129
    %p131 = scmp.le.s32.totalorder 1, %s10
    %p132 = scmp.lt.s32.totalorder %s10, 3
    %p133 = pnand %p131, %p132
    %p134 = pneg %p133
    // Predicated region
    $region9: #{tpu_custom_call.1} parent=5 // pred_check
      _
    $region10: #{tpu_custom_call.1} parent=5 // pred_check_branch
      %136 = sbr.rel (%p133) target = $region12
    $region11: #{tpu_custom_call.1} parent=5 // pred_region
      %s137 = ssub.s32 %s10, 1
      // Predicated region
      $region13: #{tpu_custom_call.1} parent=11 // pred_check
        %p138 = pneg %p71
      $region14: #{tpu_custom_call.1} parent=11 // pred_check_branch
        %140 = sbr.rel (%p138) target = $region16
      $region15: #{tpu_custom_call.1} parent=11 // pred_region
        _
      $region16: #{tpu_custom_call.1} parent=11 // pred_fallthru
        _
    $region12: #{tpu_custom_call.1} parent=5 // pred_fallthru
      _
    %p141 = scmp.lt.s32.totalorder %s10, 2
    // Predicated region
    $region17: #{tpu_custom_call.1} parent=5 // pred_check
      %p142 = pneg %p141
    $region18: #{tpu_custom_call.1} parent=5 // pred_check_branch
      %144 = sbr.rel (%p142) target = $region20
    $region19: #{tpu_custom_call.1} parent=5 // pred_region
      // Predicated region
      $region21: #{tpu_custom_call.1} parent=19 // pred_check
        %p145 = pneg %p44
      $region22: #{tpu_custom_call.1} parent=19 // pred_check_branch
        %147 = sbr.rel (%p145) target = $region24
      $region23: #{tpu_custom_call.1} parent=19 // pred_region
        %p148 = scmp.lt.s32.totalorder %s17, 1
        %s149 = scalar_select %p148, %s17, 1
        %p150 = scmp.lt.s32.totalorder %s18, 0
        %s151 = scalar_select %p150, %s18, 0
        %s152 = sadd.s32 %s151, %s149
        %s153 = smul.addr %s152, 4
        %s154 = scalar_lea.vmem %s0, %s153
      $region24: #{tpu_custom_call.1} parent=19 // pred_fallthru
        _
    $region20: #{tpu_custom_call.1} parent=5 // pred_fallthru
      _
    %p155 = scmp.le.s32.totalorder 1, %s10
    %p156 = scmp.lt.s32.totalorder %s10, 3
    %p157 = pnand %p155, %p156
    %p158 = pneg %p157
    // Predicated region
    $region25: #{tpu_custom_call.1} parent=5 // pred_check
      _
    $region26: #{tpu_custom_call.1} parent=5 // pred_check_branch
      %160 = sbr.rel (%p157) target = $region28
    $region27: #{tpu_custom_call.1} parent=5 // pred_region
      %s161 = ssub.s32 %s10, 1
      %p162 = scmp.lt.s32.totalorder %s19, 1
      %s163 = scalar_select %p162, %s19, 1
      %p164 = scmp.lt.s32.totalorder %s20, 0
      %s165 = scalar_select %p164, %s20, 0
      %s166 = sadd.s32 %s165, %s163
      %s167 = smul.addr %s166, 4
      %s168 = scalar_lea.vmem %s0, %s167
      %p169 = pneg %p50
      %p170 = pneg %p47
      %p171 = pneg %p71
      %p172 = pneg %p68
      %p173 = pneg %p97
      %p174 = pneg %p94
      %p175 = scmp.lt.s32.totalorder %s19, 1
      %s176 = scalar_select %p175, %s19, 1
      %s177 = smul.addr %s176, 8
      %s178 = scalar_lea.vmem %s2, %s177
      %p179 = pneg %p123
      %p180 = pneg %p120
      %p181 = scmp.lt.s32.totalorder %s19, 1
      %s182 = scalar_select %p181, %s19, 1
      %s183 = smul.addr %s182, 8
      %s184 = scalar_lea.vmem %s3, %s183
      %p185 = scmp.lt.s32.totalorder %s19, 1
      %s186 = scalar_select %p185, %s19, 1
      %p187 = scmp.lt.s32.totalorder %s20, 0
      %s188 = scalar_select %p187, %s20, 0
      %s189 = sadd.s32 %s188, %s186
      %s190 = smul.addr %s189, 4
      %s191 = scalar_lea.vmem %s0, %s190
      %p192 = scmp.lt.s32.totalorder %s19, 1
      %s193 = scalar_select %p192, %s19, 1
      %s194 = smul.addr %s193, 8
      %s195 = scalar_lea.vmem %s2, %s194
      %p196 = scmp.lt.s32.totalorder %s19, 1
      %s197 = scalar_select %p196, %s19, 1
      %s198 = smul.addr %s197, 8
      %s199 = scalar_lea.vmem %s3, %s198
      %p200 = scmp.eq.s32.totalorder %s20, 0
      // Predicated region
      $region29: #{tpu_custom_call.1} parent=27 // pred_check
        %p201 = pneg %p200
      $region30: #{tpu_custom_call.1} parent=27 // pred_check_branch
        %203 = sbr.rel (%p201) target = $region32
      $region31: #{tpu_custom_call.1} parent=27 // pred_region
        %vm204 = vcmask 7168
        %205 = vst.msk [vmem:[%s195] sm:$0xff] %vm204, 0.0
        %206 = vst.msk [vmem:[%s199] sm:$0xff] %vm204, 0.0
      $region32: #{tpu_custom_call.1} parent=27 // pred_fallthru
        _
      %v207 = vld [vmem:[%s1] sm:$0xff]
      %v208 = vld [vmem:[%s191] sm:$0xf]
      %vm209 = vcmask 31744
      %v211 = vsel %vm209, %v207, 0
      %vm213 = vcmask 1043456
      %v215 = vsel %vm213, %v208, 0
      %217 = vmatprep.subr.mxu0 0.0
      %218 = vmatpush1.msra.mxu0 0.0
      %219 = vmatprep.subr.mxu0 0.0
      %220 = vmatpush1.msra.mxu0 0.0
      %221 = vmatprep.subr.mxu0 0.0
      %222 = vmatpush1.msra.mxu0 0.0
      %223 = vmatprep.subr.mxu0 0.0
      %224 = vmatpush1.msra.mxu0 0.0
      %225 = vmatprep.subr.mxu0 0.0
      %226 = vmatpush1.msra.mxu0 0.0
      %227 = vmatprep.subr.mxu0 0.0
      %228 = vmatpush1.msra.mxu0 0.0
      %229 = vmatprep.subr.mxu0 0.0
      %230 = vmatpush1.msra.mxu0 0.0
      %231 = vmatprep.subr.mxu0 0.0
      %232 = vmatpush1.msra.mxu0 0.0
      %233 = vmatprep.subr.mxu0 0.0
      %234 = vmatpush1.msra.mxu0 0.0
      %235 = vmatprep.subr.mxu0 0.0
      %236 = vmatpush1.msra.mxu0 0.0
      %237 = vmatprep.subr.mxu0 0.0
      %238 = vmatpush1.msra.mxu0 0.0
      %239 = vmatprep.subr.mxu0 0.0
      %240 = vmatpush1.msra.mxu0 0.0
      %241 = vmatprep.subr.mxu0 0.0
      %242 = vmatpush1.msra.mxu0 0.0
      %243 = vmatprep.subr.mxu0 0.0
      %244 = vmatpush1.msra.mxu0 0.0
      %245 = vmatprep.subr.mxu0 0.0
      %246 = vmatpush1.msra.mxu0 0.0
      %247 = vmatprep.subr.mxu0 0.0
      %248 = vmatpush1.msra.mxu0 %v215
      %249 = vmatprep.subr.mxu0 0.0
      %250 = vmatpush2.msra.mxu0 0.0
      %251 = vmatprep.subr.mxu0 0.0
      %252 = vmatpush2.msra.mxu0 0.0
      %253 = vmatprep.subr.mxu0 0.0
      %254 = vmatpush2.msra.mxu0 0.0
      %255 = vmatprep.subr.mxu0 0.0
      %256 = vmatpush2.msra.mxu0 0.0
      %257 = vmatprep.subr.mxu0 0.0
      %258 = vmatpush2.msra.mxu0 0.0
      %259 = vmatprep.subr.mxu0 0.0
      %260 = vmatpush2.msra.mxu0 0.0
      %261 = vmatprep.subr.mxu0 0.0
      %262 = vmatpush2.msra.mxu0 0.0
      %263 = vmatprep.subr.mxu0 0.0
      %264 = vmatpush2.msra.mxu0 0.0
      %265 = vmatprep.subr.mxu0 0.0
      %266 = vmatpush2.msra.mxu0 0.0
      %267 = vmatprep.subr.mxu0 0.0
      %268 = vmatpush2.msra.mxu0 0.0
      %269 = vmatprep.subr.mxu0 0.0
      %270 = vmatpush2.msra.mxu0 0.0
      %271 = vmatprep.subr.mxu0 0.0
      %272 = vmatpush2.msra.mxu0 0.0
      %273 = vmatprep.subr.mxu0 0.0
      %274 = vmatpush2.msra.mxu0 0.0
      %275 = vmatprep.subr.mxu0 0.0
      %276 = vmatpush2.msra.mxu0 0.0
      %277 = vmatprep.subr.mxu0 0.0
      %278 = vmatpush2.msra.mxu0 0.0
      %279 = vmatprep.subr.mxu0 0.0
      %280 = vmatpush2.msra.mxu0 0.0
      %281 = vmatprep.mubr.f32.mxu0 0.0
      %282 = vmatmul.mubr.f32.gmra.mxu0 %v211
      %v283 = vpop.f32.mrf.mxu0
      %v284 = vadd.f32 0.0, %v283
      %v285 = vpop.f32.mrf.mxu0
      %286 = vdwg.mxu0
      %v287 = vld [vmem:[%s195] sm:$0xff]
      %288 = vadd.xlane.f32.xlu0 %v284
      %v289 = vpop.xlane.xlu0 %288
      %v290 = vadd.f32 %v287, %v289
      %vm291 = vcmask 7168
      %292 = vst.msk [vmem:[%s195] sm:$0xff] %vm291, %v290
      %v293 = vld [vmem:[%s199] sm:$0xff]
      %v294 = vmul.f32 %v284, %v284
      %295 = vadd.xlane.f32.xlu0 %v294
      %v296 = vpop.xlane.xlu0 %295
      %v297 = vadd.f32 %v293, %v296
      %298 = vst.msk [vmem:[%s199] sm:$0xff] %vm291, %v297
      %p299 = scmp.lt.s32.totalorder %s19, 1
      %s300 = scalar_select %p299, %s19, 1
      %s301 = smul.addr %s300, 8
      %s302 = scalar_lea.vmem %s2, %s301
      %p303 = scmp.lt.s32.totalorder %s19, 1
      %s304 = scalar_select %p303, %s19, 1
      %s305 = smul.addr %s304, 8
      %s306 = scalar_lea.vmem %s3, %s305
      // Predicated region
      $region33: #{tpu_custom_call.1} parent=27 // pred_check
        %p307 = pneg %p94
      $region34: #{tpu_custom_call.1} parent=27 // pred_check_branch
        %309 = sbr.rel (%p307) target = $region36
      $region35: #{tpu_custom_call.1} parent=27 // pred_region
        _
      $region36: #{tpu_custom_call.1} parent=27 // pred_fallthru
        _
      // Predicated region
      $region37: #{tpu_custom_call.1} parent=27 // pred_check
        %p310 = pneg %p120
      $region38: #{tpu_custom_call.1} parent=27 // pred_check_branch
        %312 = sbr.rel (%p310) target = $region40
      $region39: #{tpu_custom_call.1} parent=27 // pred_region
        _
      $region40: #{tpu_custom_call.1} parent=27 // pred_fallthru
        _
    $region28: #{tpu_custom_call.1} parent=5 // pred_fallthru
      _
    %p313 = scmp.le.s32.totalorder 2, %s10
    // Predicated region
    $region41: #{tpu_custom_call.1} parent=5 // pred_check
      %p314 = pneg %p313
    $region42: #{tpu_custom_call.1} parent=5 // pred_check_branch
      %316 = sbr.rel (%p314) target = $region44
    $region43: #{tpu_custom_call.1} parent=5 // pred_region
      %s317 = ssub.s32 %s10, 2
      // Predicated region
      $region45: #{tpu_custom_call.1} parent=43 // pred_check
        %p318 = pneg %p100
      $region46: #{tpu_custom_call.1} parent=43 // pred_check_branch
        %320 = sbr.rel (%p318) target = $region48
      $region47: #{tpu_custom_call.1} parent=43 // pred_region
        %p321 = scmp.lt.s32.totalorder %s21, 1
        %s322 = scalar_select %p321, %s21, 1
        %s323 = smul.addr %s322, 8
        %s324 = scalar_lea.vmem %s2, %s323
      $region48: #{tpu_custom_call.1} parent=43 // pred_fallthru
        _
      // Predicated region
      $region49: #{tpu_custom_call.1} parent=43 // pred_check
        %p325 = pneg %p126
      $region50: #{tpu_custom_call.1} parent=43 // pred_check_branch
        %327 = sbr.rel (%p325) target = $region52
      $region51: #{tpu_custom_call.1} parent=43 // pred_region
        %p328 = scmp.lt.s32.totalorder %s21, 1
        %s329 = scalar_select %p328, %s21, 1
        %s330 = smul.addr %s329, 8
        %s331 = scalar_lea.vmem %s3, %s330
      $region52: #{tpu_custom_call.1} parent=43 // pred_fallthru
        _
    $region44: #{tpu_custom_call.1} parent=5 // pred_fallthru
      _
  $region6: #{tpu_custom_call.1} parent=0 // loop_footer
    %s14 = sadd.s32 1, %s10
  $region7: #{tpu_custom_call.1} parent=0 // loop_footer_branch
    %9 = sbr.rel target = $region3
  $region8: #{tpu_custom_call.1} parent=0 // loop_exit
    _

</llo_original>
